<compile_context>
chip_gen: v7x
topology: tpu7x:2x2x1
jax: 0.10.0
libtpu: 0.0.40
codegen_flags: <defaults>
</compile_context>

<pallas_src>
import functools
import math

import jax
import jax.numpy as jnp
from jax.experimental import pallas as pl
from jax.experimental.pallas import tpu as pltpu


def _round_up(x, m):
    return (x + m - 1) // m * m


# ----------------------------- Pallas kernels -----------------------------

def _matmul_bias_kernel(*refs, relu, has_res):
    """Full-K matmul tile with fused bias (+BN folded into W), residual, ReLU.

    Operands a/b are bf16; accumulation and the whole epilogue stay f32.
    """
    if has_res:
        a_ref, b_ref, c_ref, r_ref, o_ref = refs
    else:
        a_ref, b_ref, c_ref, o_ref = refs
        r_ref = None

    y = jnp.dot(a_ref[...], b_ref[...], preferred_element_type=jnp.float32)
    y = y + c_ref[...]                              # bias (f32)
    if r_ref is not None:
        y = y + r_ref[...].astype(jnp.float32)      # residual add (f32)
    if relu:
        y = jnp.maximum(y, 0.0)
    o_ref[...] = y.astype(o_ref.dtype)


def _maxpool_kernel(*refs):
    # elementwise max over the 9 shifted 3x3 window taps (lane-dense layout)
    o_ref = refs[-1]
    y = refs[0][...]
    for r in refs[1:-1]:
        y = jnp.maximum(y, r[...])
    o_ref[...] = y


# ----------------------------- Pallas wrappers -----------------------------

def matmul_bias(a_bf16, w_bf16, bias_f32, residual=None, relu=False):
    """a: (M, K) bf16, w: (K, N) bf16, bias: (1, N) f32, residual: (M, N) f32."""
    M, K = a_bf16.shape
    _, N = w_bf16.shape

    # Right-size the M tile: multiple of 8, capped at 128.  K and N are a single
    # full block each (all ResNet-18 convs fit comfortably in VMEM in bf16).
    tm = min(128, _round_up(M, 8))
    Mp = _round_up(M, tm)
    if Mp != M:
        a_bf16 = jnp.pad(a_bf16, ((0, Mp - M), (0, 0)))

    has_res = residual is not None
    args = [a_bf16, w_bf16, bias_f32]
    in_specs = [
        pl.BlockSpec((tm, K), lambda i: (i, 0)),
        pl.BlockSpec((K, N), lambda i: (0, 0)),     # weights resident across M tiles
        pl.BlockSpec((1, N), lambda i: (0, 0)),
    ]
    if has_res:
        r = residual
        if Mp != M:
            r = jnp.pad(r, ((0, Mp - M), (0, 0)))
        args.append(r)
        in_specs.append(pl.BlockSpec((tm, N), lambda i: (i, 0)))

    kernel = functools.partial(_matmul_bias_kernel, relu=relu, has_res=has_res)

    out = pl.pallas_call(
        kernel,
        out_shape=jax.ShapeDtypeStruct((Mp, N), jnp.float32),
        grid_spec=pltpu.PrefetchScalarGridSpec(
            num_scalar_prefetch=0,
            grid=(Mp // tm,),
            in_specs=in_specs,
            out_specs=pl.BlockSpec((tm, N), lambda i: (i, 0)),
        ),
        compiler_params=pltpu.CompilerParams(
            dimension_semantics=("parallel",),
            vmem_limit_bytes=32 * 1024 * 1024),
    )(*args)
    if Mp != M:
        out = out[:M]
    return out


def _im2col(x, kh, kw, stride, pad):
    """x: NHWC f32 -> (N*OH*OW, kh*kw*C) bf16 patches (order matches HWIO weights)."""
    # TODO(synk): fold the patch extraction into the pallas_call (per-tap reduction
    # with strided-window index maps) instead of materializing patches via XLA.
    N, H, W, C = x.shape
    OH = (H + 2 * pad - kh) // stride + 1
    OW = (W + 2 * pad - kw) // stride + 1
    if pad:
        x = jnp.pad(x, ((0, 0), (pad, pad), (pad, pad), (0, 0)))
    x = x.astype(jnp.bfloat16)              # bf16 operand; halves patch HBM traffic
    cols = []
    for i in range(kh):
        for j in range(kw):
            cols.append(x[:, i:i + stride * (OH - 1) + 1:stride,
                          j:j + stride * (OW - 1) + 1:stride, :])
    if kh == 1 and kw == 1:
        patches = cols[0]
    else:
        patches = jnp.stack(cols, axis=3)   # (N, OH, OW, kh*kw, C)
    return patches.reshape(N * OH * OW, kh * kw * C), (N, OH, OW)


def conv_bn(x, cp, relu=False, residual=None):
    """x: NHWC f32.  cp holds bf16 (K, OC) weights (BN scale folded in) + f32 bias."""
    kh, kw, stride, pad = cp['kh'], cp['kw'], cp['stride'], cp['pad']
    cols, (N, OH, OW) = _im2col(x, kh, kw, stride, pad)
    OC = cp['w'].shape[1]
    res2d = residual.reshape(N * OH * OW, OC) if residual is not None else None
    y = matmul_bias(cols, cp['w'], cp['b'], residual=res2d, relu=relu)
    return y.reshape(N, OH, OW, OC)


def maxpool_3x3_s2(x):
    """PyTorch MaxPool2d(kernel_size=3, stride=2, padding=1). x: NHWC f32."""
    # TODO(synk): the 9 window taps are still gathered via XLA strided slices; a
    # fully fused row-window kernel would read the activation only once.
    N, H, W, C = x.shape
    k, stride, pad = 3, 2, 1
    OH = (H + 2 * pad - k) // stride + 1
    OW = (W + 2 * pad - k) // stride + 1
    xp = jnp.pad(x, ((0, 0), (pad, pad), (pad, pad), (0, 0)),
                 constant_values=-jnp.inf)

    R = N * OH
    Cw = OW * C                              # lane-dense last dim (unmasked stores)
    taps = []
    for i in range(k):
        for j in range(k):
            t = xp[:, i:i + stride * (OH - 1) + 1:stride,
                   j:j + stride * (OW - 1) + 1:stride, :]
            taps.append(t.reshape(R, Cw))

    tr = min(128, _round_up(R, 8))
    Rp = _round_up(R, tr)
    if Rp != R:
        taps = [jnp.pad(t, ((0, Rp - R), (0, 0))) for t in taps]

    out = pl.pallas_call(
        _maxpool_kernel,
        out_shape=jax.ShapeDtypeStruct((Rp, Cw), jnp.float32),
        grid=(Rp // tr,),
        in_specs=[pl.BlockSpec((tr, Cw), lambda i: (i, 0)) for _ in taps],
        out_specs=pl.BlockSpec((tr, Cw), lambda i: (i, 0)),
        compiler_params=pltpu.CompilerParams(
            dimension_semantics=("parallel",)),
    )(*taps)
    if Rp != R:
        out = out[:R]
    return out.reshape(N, OH, OW, C)


# ----------------------------- ResNet-18 encoder -----------------------------

def _kaiming(key, shape):
    # nn.init.kaiming_normal_(w, mode='fan_out', nonlinearity='relu')
    oc, ic, kh, kw = shape
    fan_out = oc * kh * kw
    std = math.sqrt(2.0 / fan_out)
    return std * jax.random.normal(key, shape, dtype=jnp.float32)


def _bn_affine(c, eps=1e-5):
    # inference-mode BN with gamma=1, beta=0, running_mean=0, running_var=1
    gamma = jnp.ones((c,), jnp.float32)
    beta = jnp.zeros((c,), jnp.float32)
    mean = jnp.zeros((c,), jnp.float32)
    var = jnp.ones((c,), jnp.float32)
    s = gamma / jnp.sqrt(var + eps)
    b = beta - mean * s
    return s, b


def _make_conv(key, oc, ic, kh, kw, stride, pad, fold_input_norm=False):
    """Build a conv+BN unit with everything folded at init:
       - weight matrix is (KH*KW*IC, OC), BN scale folded in, stored in bf16
       - bias is the BN bias (plus the stem's input-normalization constant)."""
    w = _kaiming(key, (oc, ic, kh, kw))
    s, b = _bn_affine(oc)
    wm = jnp.transpose(w, (2, 3, 1, 0)).reshape(kh * kw * ic, oc)
    wm = wm * s[None, :]                     # fold BN scale into the weights
    bias = b
    if fold_input_norm:
        # fold (x - 0.45) / 0.225 of the stem into conv1:
        #   conv((x-0.45)/0.225) * s + b == x @ (W*s/0.225) + (b - 0.45*sum_K(W*s/0.225))
        wm = wm / 0.225
        bias = bias - 0.45 * jnp.sum(wm, axis=0)
    return {'w': wm.astype(jnp.bfloat16),
            'b': bias.reshape(1, oc).astype(jnp.float32),
            'kh': kh, 'kw': kw, 'stride': stride, 'pad': pad}


def make_params(key):
    keys = iter(jax.random.split(key, 64))
    params = {}
    params['conv1'] = _make_conv(next(keys), 64, 3, 7, 7, stride=2, pad=3,
                                 fold_input_norm=True)
    inplanes = 64
    for li, planes in enumerate([64, 128, 256, 512], start=1):
        layer_stride = 1 if li == 1 else 2
        blocks = []
        for bi in range(2):                  # resnet18: [2, 2, 2, 2]
            s = layer_stride if bi == 0 else 1
            bp = {
                'conv1': _make_conv(next(keys), planes, inplanes, 3, 3, s, 1),
                'conv2': _make_conv(next(keys), planes, planes, 3, 3, 1, 1),
            }
            if s != 1 or inplanes != planes:
                bp['down'] = _make_conv(next(keys), planes, inplanes, 1, 1, s, 0)
            blocks.append(bp)
            inplanes = planes
        params[f'layer{li}'] = blocks
    return params


def basic_block(x, bp):
    out = conv_bn(x, bp['conv1'], relu=True)
    if 'down' in bp:
        identity = conv_bn(x, bp['down'], relu=False)
    else:
        identity = x
    # out = relu(bn2(conv2(out)) + identity) -- residual + relu fused in epilogue
    out = conv_bn(out, bp['conv2'], relu=True, residual=identity)
    return out


def _run_layer(x, blocks):
    for bp in blocks:
        x = basic_block(x, bp)
    return x


def resnet_encoder_forward(params, input_image_nchw):
    """Matches ResnetEncoder.forward: returns list of 5 feature maps (NCHW)."""
    x = jnp.transpose(input_image_nchw, (0, 2, 3, 1))       # NCHW -> NHWC
    # (x - 0.45) / 0.225 is folded into conv1's weights/bias (no extra HBM pass)
    f1 = conv_bn(x, params['conv1'], relu=True)              # relu(bn1(conv1(xn)))
    x = maxpool_3x3_s2(f1)
    f2 = _run_layer(x, params['layer1'])
    f3 = _run_layer(f2, params['layer2'])
    f4 = _run_layer(f3, params['layer3'])
    f5 = _run_layer(f4, params['layer4'])
    feats = [f1, f2, f3, f4, f5]
    return [jnp.transpose(f, (0, 3, 1, 2)) for f in feats]   # back to NCHW


# ----------------------------- driver -----------------------------

if __name__ == "__main__":
    key = jax.random.PRNGKey(0)
    k_params, k_input = jax.random.split(key)

    params = make_params(k_params)
    # batch=2, channels=3 (ResNet stem expects 3), spatial=64 so layer4 is 2x2
    x = jax.random.uniform(k_input, (2, 3, 64, 64), dtype=jnp.float32)

    feats = resnet_encoder_forward(params, x)
    feats = [jax.block_until_ready(f) for f in feats]

    expected = [(2, 64, 32, 32), (2, 64, 16, 16), (2, 128, 8, 8),
                (2, 256, 4, 4), (2, 512, 2, 2)]
    assert [tuple(f.shape) for f in feats] == expected, \
        [tuple(f.shape) for f in feats]
    assert all(jnp.all(jnp.isfinite(f)) for f in feats)

    print("KERNEL_OK")
</pallas_src>

<mosaic_0001>
module attributes {stable_mosaic.version = 11 : i64} {
  func.func @_matmul_bias_kernel(%arg0: i32, %arg1: memref<128x147xbf16, #tpu.memory_space<vmem>>, %arg2: memref<147x64xbf16, #tpu.memory_space<vmem>>, %arg3: memref<1x64xf32, #tpu.memory_space<vmem>>, %arg4: memref<128x64xf32, #tpu.memory_space<vmem>>) attributes {dimension_semantics = [#tpu.dimension_semantics<parallel>], iteration_bounds = array<i64: 16>, scalar_prefetch = 0 : i64, scratch_operands = 0 : i64, tpu.core_type = #tpu.core_type<tc>, window_params = [{transform_indices = @transform_0, window_bounds = array<i64: 128, 147>}, {pipeline_mode = #tpu.pipeline_mode<synchronous>, transform_indices = @transform_1, window_bounds = array<i64: 147, 64>}, {pipeline_mode = #tpu.pipeline_mode<synchronous>, transform_indices = @transform_2, window_bounds = array<i64: 1, 64>}, {transform_indices = @transform_3, window_bounds = array<i64: 128, 64>}]} {
    %c0 = arith.constant 0 : index
    %c0_0 = arith.constant 0 : index
    %0 = vector.load %arg1[%c0, %c0_0] : memref<128x147xbf16, #tpu.memory_space<vmem>>, vector<128x147xbf16>
    %c0_1 = arith.constant 0 : index
    %c0_2 = arith.constant 0 : index
    %1 = vector.load %arg2[%c0_1, %c0_2] : memref<147x64xbf16, #tpu.memory_space<vmem>>, vector<147x64xbf16>
    %cst = arith.constant dense<0.000000e+00> : vector<128x64xf32>
    %2 = tpu.matmul %0, %1, %cst {dimension_numbers = #tpu.dot_dimension_numbers<[1], [0], [0], [1], [0, 0, 1, 1], [], []>} : vector<128x147xbf16>, vector<147x64xbf16>, vector<128x64xf32> -> vector<128x64xf32>
    %c0_3 = arith.constant 0 : index
    %c0_4 = arith.constant 0 : index
    %3 = vector.load %arg3[%c0_3, %c0_4] : memref<1x64xf32, #tpu.memory_space<vmem>>, vector<1x64xf32>
    %4 = vector.broadcast %3 : vector<1x64xf32> to vector<128x64xf32>
    %5 = arith.addf %2, %4 : vector<128x64xf32>
    %cst_5 = arith.constant 0.000000e+00 : f32
    %6 = vector.broadcast %cst_5 : f32 to vector<128x64xf32>
    %7 = arith.maximumf %5, %6 : vector<128x64xf32>
    %c0_6 = arith.constant 0 : index
    %c0_7 = arith.constant 0 : index
    %8 = vector.load %arg4[%c0_6, %c0_7] : memref<128x64xf32, #tpu.memory_space<vmem>>, vector<128x64xf32>
    tpu.vector_store %arg4[%c0_6, %c0_7], %7 {strides = array<i32>} : memref<128x64xf32, #tpu.memory_space<vmem>>, vector<128x64xf32>,
    return
  }
  func.func @transform_0(%arg0: i32) -> (i32, i32) {
    %c0_i32 = arith.constant 0 : i32
    %c0_i32_0 = arith.constant 0 : i32
    return %arg0, %c0_i32 : i32, i32
  }
  func.func @transform_1(%arg0: i32) -> (i32, i32) {
    %c0_i32 = arith.constant 0 : i32
    %c0_i32_0 = arith.constant 0 : i32
    %c0_i32_1 = arith.constant 0 : i32
    return %c0_i32, %c0_i32_0 : i32, i32
  }
  func.func @transform_2(%arg0: i32) -> (i32, i32) {
    %c0_i32 = arith.constant 0 : i32
    %c0_i32_0 = arith.constant 0 : i32
    %c0_i32_1 = arith.constant 0 : i32
    return %c0_i32, %c0_i32_0 : i32, i32
  }
  func.func @transform_3(%arg0: i32) -> (i32, i32) {
    %c0_i32 = arith.constant 0 : i32
    %c0_i32_0 = arith.constant 0 : i32
    return %arg0, %c0_i32 : i32, i32
  }
}

</mosaic_0001>

<llo_original>
// kernel: tpu_custom_call.1
$region0: #{tpu_custom_call.1}
  #allocation0 [shape = 'u32[]', space=smem, size = 0x4, offset = 0x4, fixed_abs, tag = 'smem constant byte address 0x4 - core index']
  #allocation1 [shape = 'u32[144,128]{1,0:T(1,128)}', space=vmem, size = 0x12000, scoped, tag = 'internal scratch']
  %s0 = inlined_call_operand.vmem [shape: bf16[2048,147], index: 0, kind: input, shape index: {}]
  %s1 = inlined_call_operand.vmem [shape: bf16[147,64], index: 1, kind: input, shape index: {}]
  %s2 = inlined_call_operand.vmem [shape: f32[1,64], index: 2, kind: input, shape index: {}]
  %s3 = inlined_call_operand.vmem [shape: f32[2048,64], index: 3, kind: output, shape index: {}]
  %s4 = sld [smem:[#allocation0]]
  $region45: #{tpu_custom_call.1} parent=0
    _
  %s6 = ssub.s32 1, %s4
  %s7 = scalar_select 0, %s6, %s4
  loop: start=0, step=1, limit=18
  $region2: #{tpu_custom_call.1} parent=0 // loop_pre_header
    _
  $region3: #{tpu_custom_call.1} parent=0 // loop_header
    %s9 = sphi 0, %s13
    %p10 = scmp.ge.s32.totalorder %s9, 18
    %s19 = sphi 0, %s21
    %s22 = sphi 0, %s19
    %s23 = sphi 0, %s22
    %s39 = sphi 0, %s23
    %s43 = sphi 0, %s43
    %s45 = sphi 0, %s43
    %s46 = sphi 0, %s45
    %s60 = sphi 0, %s46
    %s64 = sphi 0, %s64
    %s66 = sphi 0, %s64
    %s67 = sphi 0, %s66
    %s81 = sphi 0, %s67
    %s87 = sphi 0, %s89
    %s90 = sphi 0, %s87
    %s91 = sphi 0, %s90
    %s107 = sphi 0, %s91
  $region4: #{tpu_custom_call.1} parent=0 // loop_header_branch
    %12 = sbr.rel (%p10) target = $region8
  $region5: #{tpu_custom_call.1} parent=0 // loop_body
    %s14 = ssub.s32 %s9, 1
    %s15 = ssub.s32 %s9, 2
    %s16 = sadd.s32 %s9, 1
    %s17 = ssub.s32 %s9, %s16
    %p18 = scmp.eq.s32.totalorder %s17, 0
    %s20 = sadd.s32 %s19, 1
    %s21 = scalar_select %p18, %s19, %s20
    %p24 = pneg %p18
    %p25 = scmp.eq.s32.totalorder %s9, 15
    %p26 = por %p24, %p25
    %p27 = scmp.ne.s32.totalorder %s19, %s22
    %p28 = scmp.eq.s32.totalorder %s9, 0
    %p29 = por %p27, %p28
    %p30 = scmp.ne.s32.totalorder %s19, %s22
    %p31 = scmp.eq.s32.totalorder %s14, 15
    %p32 = por %p30, %p31
    %p33 = scmp.ne.s32.totalorder %s22, %s23
    %p34 = scmp.eq.s32.totalorder %s14, 0
    %p35 = por %p33, %p34
    %p36 = scmp.ne.s32.totalorder %s22, %s23
    %p37 = scmp.eq.s32.totalorder %s15, 15
    %p38 = por %p36, %p37
    %p40 = scmp.ne.s32.totalorder %s23, %s39
    %p41 = scmp.eq.s32.totalorder %s15, 0
    %p42 = por %p40, %p41
    %s44 = sadd.s32 %s43, 1
    %p47 = scmp.eq.s32.totalorder %s9, 15
    %p48 = scmp.ne.s32.totalorder %s43, %s45
    %p49 = scmp.eq.s32.totalorder %s9, 0
    %p50 = por %p48, %p49
    %p51 = scmp.ne.s32.totalorder %s43, %s45
    %p52 = scmp.eq.s32.totalorder %s14, 15
    %p53 = por %p51, %p52
    %p54 = scmp.ne.s32.totalorder %s45, %s46
    %p55 = scmp.eq.s32.totalorder %s14, 0
    %p56 = por %p54, %p55
    %p57 = scmp.ne.s32.totalorder %s45, %s46
    %p58 = scmp.eq.s32.totalorder %s15, 15
    %p59 = por %p57, %p58
    %p61 = scmp.ne.s32.totalorder %s46, %s60
    %p62 = scmp.eq.s32.totalorder %s15, 0
    %p63 = por %p61, %p62
    %s65 = sadd.s32 %s64, 1
    %p68 = scmp.eq.s32.totalorder %s9, 15
    %p69 = scmp.ne.s32.totalorder %s64, %s66
    %p70 = scmp.eq.s32.totalorder %s9, 0
    %p71 = por %p69, %p70
    %p72 = scmp.ne.s32.totalorder %s64, %s66
    %p73 = scmp.eq.s32.totalorder %s14, 15
    %p74 = por %p72, %p73
    %p75 = scmp.ne.s32.totalorder %s66, %s67
    %p76 = scmp.eq.s32.totalorder %s14, 0
    %p77 = por %p75, %p76
    %p78 = scmp.ne.s32.totalorder %s66, %s67
    %p79 = scmp.eq.s32.totalorder %s15, 15
    %p80 = por %p78, %p79
    %p82 = scmp.ne.s32.totalorder %s67, %s81
    %p83 = scmp.eq.s32.totalorder %s15, 0
    %p84 = por %p82, %p83
    %s85 = ssub.s32 %s9, %s16
    %p86 = scmp.eq.s32.totalorder %s85, 0
    %s88 = sadd.s32 %s87, 1
    %s89 = scalar_select %p86, %s87, %s88
    %p92 = pneg %p86
    %p93 = scmp.eq.s32.totalorder %s9, 15
    %p94 = por %p92, %p93
    %p95 = scmp.ne.s32.totalorder %s87, %s90
    %p96 = scmp.eq.s32.totalorder %s9, 0
    %p97 = por %p95, %p96
    %p98 = scmp.ne.s32.totalorder %s87, %s90
    %p99 = scmp.eq.s32.totalorder %s14, 15
    %p100 = por %p98, %p99
    %p101 = scmp.ne.s32.totalorder %s90, %s91
    %p102 = scmp.eq.s32.totalorder %s14, 0
    %p103 = por %p101, %p102
    %p104 = scmp.ne.s32.totalorder %s90, %s91
    %p105 = scmp.eq.s32.totalorder %s15, 15
    %p106 = por %p104, %p105
    %p108 = scmp.ne.s32.totalorder %s91, %s107
    %p109 = scmp.eq.s32.totalorder %s15, 0
    %p110 = por %p108, %p109
    %p111 = scmp.le.s32.totalorder 1, %s9
    %p112 = scmp.lt.s32.totalorder %s9, 17
    %p113 = pnand %p111, %p112
    %p114 = pneg %p113
    // Predicated region
    $region9: #{tpu_custom_call.1} parent=5 // pred_check
      _
    $region10: #{tpu_custom_call.1} parent=5 // pred_check_branch
      %116 = sbr.rel (%p113) target = $region12
    $region11: #{tpu_custom_call.1} parent=5 // pred_region
      %s117 = ssub.s32 %s9, 1
      // Predicated region
      $region13: #{tpu_custom_call.1} parent=11 // pred_check
        %p118 = pneg %p56
      $region14: #{tpu_custom_call.1} parent=11 // pred_check_branch
        %120 = sbr.rel (%p118) target = $region16
      $region15: #{tpu_custom_call.1} parent=11 // pred_region
        _
      $region16: #{tpu_custom_call.1} parent=11 // pred_fallthru
        _
      // Predicated region
      $region17: #{tpu_custom_call.1} parent=11 // pred_check
        %p121 = pneg %p77
      $region18: #{tpu_custom_call.1} parent=11 // pred_check_branch
        %123 = sbr.rel (%p121) target = $region20
      $region19: #{tpu_custom_call.1} parent=11 // pred_region
        _
      $region20: #{tpu_custom_call.1} parent=11 // pred_fallthru
        _
    $region12: #{tpu_custom_call.1} parent=5 // pred_fallthru
      _
    %p124 = scmp.lt.s32.totalorder %s9, 16
    // Predicated region
    $region21: #{tpu_custom_call.1} parent=5 // pred_check
      %p125 = pneg %p124
    $region22: #{tpu_custom_call.1} parent=5 // pred_check_branch
      %127 = sbr.rel (%p125) target = $region24
    $region23: #{tpu_custom_call.1} parent=5 // pred_region
      // Predicated region
      $region25: #{tpu_custom_call.1} parent=23 // pred_check
        %p128 = pneg %p29
      $region26: #{tpu_custom_call.1} parent=23 // pred_check_branch
        %130 = sbr.rel (%p128) target = $region28
      $region27: #{tpu_custom_call.1} parent=23 // pred_region
        %s131 = smul.u32 16, %s9
        %p132 = scmp.lt.s32.totalorder %s131, 255
        %s133 = scalar_select %p132, %s131, 255
        %s134 = smul.addr %s133, 2
        %s135 = smul.addr %s134, 4
        %s136 = scalar_lea.vmem %s0, %s135
        %s137 = smul.u32 16, %s9
      $region28: #{tpu_custom_call.1} parent=23 // pred_fallthru
        _
    $region24: #{tpu_custom_call.1} parent=5 // pred_fallthru
      _
    %p138 = scmp.le.s32.totalorder 1, %s9
    %p139 = scmp.lt.s32.totalorder %s9, 17
    %p140 = pnand %p138, %p139
    %p141 = pneg %p140
    // Predicated region
    $region29: #{tpu_custom_call.1} parent=5 // pred_check
      _
    $region30: #{tpu_custom_call.1} parent=5 // pred_check_branch
      %143 = sbr.rel (%p140) target = $region32
    $region31: #{tpu_custom_call.1} parent=5 // pred_region
      %s144 = ssub.s32 %s9, 1
      %s145 = smul.u32 16, %s14
      %p146 = scmp.lt.s32.totalorder %s145, 255
      %s147 = scalar_select %p146, %s145, 255
      %s148 = smul.addr %s147, 2
      %s149 = smul.addr %s148, 4
      %s150 = scalar_lea.vmem %s0, %s149
      %p151 = pneg %p35
      %p152 = pneg %p32
      %p153 = pneg %p56
      %p154 = pneg %p53
      %p155 = pneg %p77
      %p156 = pneg %p74
      %p157 = pneg %p103
      %p158 = pneg %p100
      %s159 = smul.u32 16, %s14
      %p160 = scmp.lt.s32.totalorder %s159, 255
      %s161 = scalar_select %p160, %s159, 255
      %s162 = smul.addr %s161, 8
      %s163 = scalar_lea.vmem %s3, %s162
      %s164 = smul.u32 16, %s14
      %p165 = scmp.lt.s32.totalorder %s164, 255
      %s166 = scalar_select %p165, %s164, 255
      %s167 = smul.addr %s166, 2
      %s168 = smul.addr %s167, 4
      %s169 = scalar_lea.vmem %s0, %s168
      %s170 = smul.u32 16, %s14
      %s171 = smul.u32 16, %s14
      %p172 = scmp.lt.s32.totalorder %s171, 255
      %s173 = scalar_select %p172, %s171, 255
      %s174 = smul.addr %s173, 8
      %s175 = scalar_lea.vmem %s3, %s174
      %s176 = smul.u32 16, %s14
      %v178 = vld [vmem:[%s169] sm:$0xff]
      %v179 = vld [vmem:[%s169 + $0x8] sm:$0xff]
      %v180 = vld [vmem:[%s169 + $0x10] sm:$0xff]
      %v181 = vld [vmem:[%s169 + $0x18] sm:$0xff]
      %v182 = vld [vmem:[%s169 + $0x20] sm:$0xff]
      %v183 = vld [vmem:[%s169 + $0x28] sm:$0xff]
      %v184 = vld [vmem:[%s169 + $0x30] sm:$0xff]
      %v185 = vld [vmem:[%s169 + $0x38] sm:$0xff]
      %v186 = vld [vmem:[%s169 + $0x40] sm:$0xff]
      %v187 = vld [vmem:[%s169 + $0x48] sm:$0xff]
      %v188 = vld [vmem:[%s169 + $0x50] sm:$0xff]
      %v189 = vld [vmem:[%s169 + $0x58] sm:$0xff]
      %v190 = vld [vmem:[%s169 + $0x60] sm:$0xff]
      %v191 = vld [vmem:[%s169 + $0x68] sm:$0xff]
      %v192 = vld [vmem:[%s169 + $0x70] sm:$0xff]
      %v193 = vld [vmem:[%s169 + $0x78] sm:$0xff]
      %v194 = vld [vmem:[%s1] sm:$0xf]
      %v195 = vld [vmem:[%s1 + $0x4] sm:$0xf]
      %v196 = vld [vmem:[%s1 + $0x8] sm:$0xf]
      %v197 = vld [vmem:[%s1 + $0xc] sm:$0xf]
      %v198 = vld [vmem:[%s1 + $0x10] sm:$0xf]
      %v199 = vld [vmem:[%s1 + $0x14] sm:$0xf]
      %v200 = vld [vmem:[%s1 + $0x18] sm:$0xf]
      %v201 = vld [vmem:[%s1 + $0x1c] sm:$0xf]
      %v202 = vld [vmem:[%s1 + $0x20] sm:$0xf]
      %v203 = vld [vmem:[%s1 + $0x24] sm:$0xf]
      %v204 = vld [vmem:[%s1 + $0x28] sm:$0xf]
      %v205 = vld [vmem:[%s1 + $0x2c] sm:$0xf]
      %v206 = vld [vmem:[%s1 + $0x30] sm:$0xf]
      %v207 = vld [vmem:[%s1 + $0x34] sm:$0xf]
      %v208 = vld [vmem:[%s1 + $0x38] sm:$0xf]
      %v209 = vld [vmem:[%s1 + $0x3c] sm:$0xf]
      %v210 = vld [vmem:[%s1 + $0x40] sm:$0xf]
      %v211 = vld [vmem:[%s1 + $0x44] sm:$0xf]
      %v212 = vld [vmem:[%s1 + $0x48] sm:$0x3]
      %v213 = vld [vmem:[%s2] sm:$0x1]
      %v215 = vlaneseq
      %v216 = vshrl.u32 %v215, 7
      %v217 = vsub.s32 0, %v216
      %v218 = vrot.slane %v213, %v217
      %v236 = vunpack.c.l.b16 %v178
      %v237 = vunpack.c.h.b16 %v178
      %v238 = vunpack.c.l.b16 %v179
      %v239 = vunpack.c.h.b16 %v179
      %v240 = vunpack.c.l.b16 %v180
      %v241 = vunpack.c.h.b16 %v180
      %v242 = vunpack.c.l.b16 %v181
      %v243 = vunpack.c.h.b16 %v181
      %v244 = vunpack.c.l.b16 %v182
      %v245 = vunpack.c.h.b16 %v182
      %v246 = vunpack.c.l.b16 %v183
      %v247 = vunpack.c.h.b16 %v183
      %v248 = vunpack.c.l.b16 %v184
      %v249 = vunpack.c.h.b16 %v184
      %v250 = vunpack.c.l.b16 %v185
      %v251 = vunpack.c.h.b16 %v185
      %v252 = vunpack.c.l.b16 %v186
      %v253 = vunpack.c.h.b16 %v186
      %v254 = vunpack.c.l.b16 %v187
      %v255 = vunpack.c.h.b16 %v187
      %v256 = vunpack.c.l.b16 %v188
      %v257 = vunpack.c.h.b16 %v188
      %v258 = vunpack.c.l.b16 %v189
      %v259 = vunpack.c.h.b16 %v189
      %v260 = vunpack.c.l.b16 %v190
      %v261 = vunpack.c.h.b16 %v190
      %v262 = vunpack.c.l.b16 %v191
      %v263 = vunpack.c.h.b16 %v191
      %v264 = vunpack.c.l.b16 %v192
      %v265 = vunpack.c.h.b16 %v192
      %v266 = vunpack.c.l.b16 %v193
      %v267 = vunpack.c.h.b16 %v193
      %v268 = vpack.c.b16 %v238, %v236
      %v269 = vpack.c.b16 %v239, %v237
      %v270 = vpack.c.b16 %v242, %v240
      %v271 = vpack.c.b16 %v243, %v241
      %v272 = vpack.c.b16 %v246, %v244
      %v273 = vpack.c.b16 %v247, %v245
      %v274 = vpack.c.b16 %v250, %v248
      %v275 = vpack.c.b16 %v251, %v249
      %v276 = vpack.c.b16 %v254, %v252
      %v277 = vpack.c.b16 %v255, %v253
      %v278 = vpack.c.b16 %v258, %v256
      %v279 = vpack.c.b16 %v259, %v257
      %v280 = vpack.c.b16 %v262, %v260
      %v281 = vpack.c.b16 %v263, %v261
      %v282 = vpack.c.b16 %v266, %v264
      %v283 = vpack.c.b16 %v267, %v265
      %v311 = vunpack.c.l.b16 %v194
      %v312 = vunpack.c.l.b16 %v195
      %v313 = vunpack.c.l.b16 %v196
      %v314 = vunpack.c.l.b16 %v197
      %v315 = vunpack.c.l.b16 %v198
      %v316 = vunpack.c.l.b16 %v199
      %v317 = vunpack.c.l.b16 %v200
      %v318 = vunpack.c.l.b16 %v201
      %v319 = vunpack.c.l.b16 %v202
      %v320 = vunpack.c.l.b16 %v203
      %v321 = vunpack.c.l.b16 %v204
      %v322 = vunpack.c.l.b16 %v205
      %v323 = vunpack.c.l.b16 %v206
      %v324 = vunpack.c.l.b16 %v207
      %v325 = vunpack.c.l.b16 %v208
      %v326 = vunpack.c.l.b16 %v209
      %v327 = vunpack.c.l.b16 %v210
      %v328 = vunpack.c.l.b16 %v211
      %v329 = vunpack.c.l.b16 %v212
      %v330 = vpack.c.b16 %v312, %v311
      %v331 = vpack.c.b16 %v314, %v313
      %v332 = vpack.c.b16 %v316, %v315
      %v333 = vpack.c.b16 %v318, %v317
      %v334 = vpack.c.b16 %v320, %v319
      %v335 = vpack.c.b16 %v322, %v321
      %v336 = vpack.c.b16 %v324, %v323
      %v337 = vpack.c.b16 %v326, %v325
      %v338 = vpack.c.b16 %v328, %v327
      %v339 = vpack.c.b16 %v329, %v329
      %vm349 = vcmask 154624
      %v351 = vsel %vm349, %v269, 0
      %v354 = vsel %vm349, %v271, 0
      %v357 = vsel %vm349, %v273, 0
      %v360 = vsel %vm349, %v275, 0
      %v363 = vsel %vm349, %v277, 0
      %v366 = vsel %vm349, %v279, 0
      %v369 = vsel %vm349, %v281, 0
      %v372 = vsel %vm349, %v283, 0
      %vm374 = vcmask 1040384
      %vm375 = vcmask 1041408
      %v376 = vsel %vm374, 4294967295, 65535
      %v377 = vsel %vm375, %v376, 0
      %v379 = vand.u32 %v339, %v377
      %381 = vmatprep.subr.bf16.mxu0 0
      %382 = vmatpush1.bf16.msra.mxu0 %v330
      %383 = vmatprep.subr.bf16.mxu0 0
      %384 = vmatpush1.bf16.msra.mxu0 %v331
      %385 = vmatprep.subr.bf16.mxu0 0
      %386 = vmatpush1.bf16.msra.mxu0 %v332
      %387 = vmatprep.subr.bf16.mxu0 0
      %388 = vmatpush1.bf16.msra.mxu0 %v333
      %389 = vmatprep.subr.bf16.mxu0 0
      %390 = vmatpush1.bf16.msra.mxu0 %v334
      %391 = vmatprep.subr.bf16.mxu0 0
      %392 = vmatpush1.bf16.msra.mxu0 %v335
      %393 = vmatprep.subr.bf16.mxu0 0
      %394 = vmatpush1.bf16.msra.mxu0 %v336
      %395 = vmatprep.subr.bf16.mxu0 0
      %396 = vmatpush1.bf16.msra.mxu0 %v337
      %397 = vmatprep.subr.bf16.mxu0 0
      %398 = vmatpush1.bf16.msra.mxu0 %v338
      %399 = vmatprep.subr.bf16.mxu0 0
      %400 = vmatpush1.bf16.msra.mxu0 %v379
      %401 = vmatprep.subr.bf16.mxu0 0
      %402 = vmatpush1.bf16.msra.mxu0 0
      %403 = vmatprep.subr.bf16.mxu0 0
      %404 = vmatpush1.bf16.msra.mxu0 0
      %405 = vmatprep.subr.bf16.mxu0 0
      %406 = vmatpush1.bf16.msra.mxu0 0
      %407 = vmatprep.subr.bf16.mxu0 0
      %408 = vmatpush1.bf16.msra.mxu0 0
      %409 = vmatprep.subr.bf16.mxu0 0
      %410 = vmatpush1.bf16.msra.mxu0 0
      %411 = vmatprep.subr.bf16.mxu0 0
      %412 = vmatpush1.bf16.msra.mxu0 0
      %413 = vmatprep.mubr.bf16.mxu0 %v351
      %414 = vmatmul.mubr.bf16.gmra.mrb[0].mxu0 %v268
      %v415 = vpop.f32.mrb[0].mxu0
      %v416 = vadd.f32 %v218, %v415
      %v417 = vpop.f32.mrb[0].mxu0
      %v418 = vpop.f32.mrb[0].mxu0
      %v419 = vadd.f32 %v218, %v418
      %v420 = vpop.f32.mrb[0].mxu0
      %421 = vmatprep.mubr.bf16.mxu0 %v354
      %422 = vmatmul.mubr.bf16.gmra.mrb[0].mxu0 %v270
      %v423 = vpop.f32.mrb[0].mxu0
      %v424 = vadd.f32 %v218, %v423
      %v425 = vpop.f32.mrb[0].mxu0
      %v426 = vpop.f32.mrb[0].mxu0
      %v427 = vadd.f32 %v218, %v426
      %v428 = vpop.f32.mrb[0].mxu0
      %429 = vmatprep.mubr.bf16.mxu0 %v357
      %430 = vmatmul.mubr.bf16.gmra.mrb[0].mxu0 %v272
      %v431 = vpop.f32.mrb[0].mxu0
      %v432 = vadd.f32 %v218, %v431
      %v433 = vpop.f32.mrb[0].mxu0
      %v434 = vpop.f32.mrb[0].mxu0
      %v435 = vadd.f32 %v218, %v434
      %v436 = vpop.f32.mrb[0].mxu0
      %437 = vmatprep.mubr.bf16.mxu0 %v360
      %438 = vmatmul.mubr.bf16.gmra.mrb[0].mxu0 %v274
      %v439 = vpop.f32.mrb[0].mxu0
      %v440 = vadd.f32 %v218, %v439
      %v441 = vpop.f32.mrb[0].mxu0
      %v442 = vpop.f32.mrb[0].mxu0
      %v443 = vadd.f32 %v218, %v442
      %v444 = vpop.f32.mrb[0].mxu0
      %445 = vmatprep.mubr.bf16.mxu0 %v363
      %446 = vmatmul.mubr.bf16.gmra.mrb[0].mxu0 %v276
      %v447 = vpop.f32.mrb[0].mxu0
      %v448 = vadd.f32 %v218, %v447
      %v449 = vpop.f32.mrb[0].mxu0
      %v450 = vpop.f32.mrb[0].mxu0
      %v451 = vadd.f32 %v218, %v450
      %v452 = vpop.f32.mrb[0].mxu0
      %453 = vmatprep.mubr.bf16.mxu0 %v366
      %454 = vmatmul.mubr.bf16.gmra.mrb[0].mxu0 %v278
      %v455 = vpop.f32.mrb[0].mxu0
      %v456 = vadd.f32 %v218, %v455
      %v457 = vpop.f32.mrb[0].mxu0
      %v458 = vpop.f32.mrb[0].mxu0
      %v459 = vadd.f32 %v218, %v458
      %v460 = vpop.f32.mrb[0].mxu0
      %461 = vmatprep.mubr.bf16.mxu0 %v369
      %462 = vmatmul.mubr.bf16.gmra.mrb[0].mxu0 %v280
      %v463 = vpop.f32.mrb[0].mxu0
      %v464 = vadd.f32 %v218, %v463
      %v465 = vpop.f32.mrb[0].mxu0
      %v466 = vpop.f32.mrb[0].mxu0
      %v467 = vadd.f32 %v218, %v466
      %v468 = vpop.f32.mrb[0].mxu0
      %469 = vmatprep.mubr.bf16.mxu0 %v372
      %470 = vmatmul.mubr.bf16.gmra.mrb[0].mxu0 %v282
      %v471 = vpop.f32.mrb[0].mxu0
      %v472 = vadd.f32 %v218, %v471
      %v473 = vpop.f32.mrb[0].mxu0
      %v474 = vpop.f32.mrb[0].mxu0
      %v475 = vadd.f32 %v218, %v474
      %v476 = vpop.f32.mrb[0].mxu0
      %477 = vdwg.mxu0
      %v478 = vmax.f32 %v416, 0.0
      %v479 = vmax.f32 %v419, 0.0
      %v480 = vmax.f32 %v424, 0.0
      %v481 = vmax.f32 %v427, 0.0
      %v482 = vmax.f32 %v432, 0.0
      %v483 = vmax.f32 %v435, 0.0
      %v484 = vmax.f32 %v440, 0.0
      %v485 = vmax.f32 %v443, 0.0
      %v486 = vmax.f32 %v448, 0.0
      %v487 = vmax.f32 %v451, 0.0
      %v488 = vmax.f32 %v456, 0.0
      %v489 = vmax.f32 %v459, 0.0
      %v490 = vmax.f32 %v464, 0.0
      %v491 = vmax.f32 %v467, 0.0
      %v492 = vmax.f32 %v472, 0.0
      %v493 = vmax.f32 %v475, 0.0
      %vm494 = vcmask 523264
      %495 = vst.msk [vmem:[%s175] sm:$0xff] %vm494, %v478
      %496 = vst.msk [vmem:[%s175 + $0x8] sm:$0xff] %vm494, %v479
      %497 = vst.msk [vmem:[%s175 + $0x10] sm:$0xff] %vm494, %v480
      %498 = vst.msk [vmem:[%s175 + $0x18] sm:$0xff] %vm494, %v481
      %499 = vst.msk [vmem:[%s175 + $0x20] sm:$0xff] %vm494, %v482
      %500 = vst.msk [vmem:[%s175 + $0x28] sm:$0xff] %vm494, %v483
      %501 = vst.msk [vmem:[%s175 + $0x30] sm:$0xff] %vm494, %v484
      %502 = vst.msk [vmem:[%s175 + $0x38] sm:$0xff] %vm494, %v485
      %503 = vst.msk [vmem:[%s175 + $0x40] sm:$0xff] %vm494, %v486
      %504 = vst.msk [vmem:[%s175 + $0x48] sm:$0xff] %vm494, %v487
      %505 = vst.msk [vmem:[%s175 + $0x50] sm:$0xff] %vm494, %v488
      %506 = vst.msk [vmem:[%s175 + $0x58] sm:$0xff] %vm494, %v489
      %507 = vst.msk [vmem:[%s175 + $0x60] sm:$0xff] %vm494, %v490
      %508 = vst.msk [vmem:[%s175 + $0x68] sm:$0xff] %vm494, %v491
      %509 = vst.msk [vmem:[%s175 + $0x70] sm:$0xff] %vm494, %v492
      %510 = vst.msk [vmem:[%s175 + $0x78] sm:$0xff] %vm494, %v493
      %s511 = smul.u32 16, %s14
      %p512 = scmp.lt.s32.totalorder %s511, 255
      %s513 = scalar_select %p512, %s511, 255
      %s514 = smul.addr %s513, 8
      %s515 = scalar_lea.vmem %s3, %s514
      // Predicated region
      $region33: #{tpu_custom_call.1} parent=31 // pred_check
        %p516 = pneg %p100
      $region34: #{tpu_custom_call.1} parent=31 // pred_check_branch
        %518 = sbr.rel (%p516) target = $region36
      $region35: #{tpu_custom_call.1} parent=31 // pred_region
        %s519 = smul.u32 16, %s14
      $region36: #{tpu_custom_call.1} parent=31 // pred_fallthru
        _
    $region32: #{tpu_custom_call.1} parent=5 // pred_fallthru
      _
    %p520 = scmp.le.s32.totalorder 2, %s9
    // Predicated region
    $region37: #{tpu_custom_call.1} parent=5 // pred_check
      %p521 = pneg %p520
    $region38: #{tpu_custom_call.1} parent=5 // pred_check_branch
      %523 = sbr.rel (%p521) target = $region40
    $region39: #{tpu_custom_call.1} parent=5 // pred_region
      %s524 = ssub.s32 %s9, 2
      // Predicated region
      $region41: #{tpu_custom_call.1} parent=39 // pred_check
        %p525 = pneg %p106
      $region42: #{tpu_custom_call.1} parent=39 // pred_check_branch
        %527 = sbr.rel (%p525) target = $region44
      $region43: #{tpu_custom_call.1} parent=39 // pred_region
        %s528 = smul.u32 16, %s15
        %p529 = scmp.lt.s32.totalorder %s528, 255
        %s530 = scalar_select %p529, %s528, 255
        %s531 = smul.addr %s530, 8
        %s532 = scalar_lea.vmem %s3, %s531
      $region44: #{tpu_custom_call.1} parent=39 // pred_fallthru
        _
    $region40: #{tpu_custom_call.1} parent=5 // pred_fallthru
      _
  $region6: #{tpu_custom_call.1} parent=0 // loop_footer
    %s13 = sadd.s32 1, %s9
  $region7: #{tpu_custom_call.1} parent=0 // loop_footer_branch
    %8 = sbr.rel target = $region3
  $region8: #{tpu_custom_call.1} parent=0 // loop_exit
    _

</llo_original>
